<compile_context>
chip_gen: v5e
topology: v5e:2x2
jax: 0.10.0
libtpu: 0.0.40
codegen_flags: <defaults>
</compile_context>

<pallas_src>
import functools

import jax
import jax.numpy as jnp
from jax import lax
from jax.experimental import pallas as pl
from jax.experimental.pallas import tpu as pltpu


def _qnet_kernel(x_ref, w1_ref, b1_ref, w2_ref, b2_ref, o_ref, *, cb, n_chunks):
    """One batch tile:  o = relu(x @ w1 + b1) @ w2 + b2.

    x_ref : (tb, obs_dim)          natural row-major activations
    w1_ref: (obs_dim, hidden)      == torch linear1.weight.T  (resident)
    b1_ref: (1, hidden)
    w2_ref: (hidden, action_dim)   == torch linear2.weight.T  (resident)
    b2_ref: (1, action_dim)
    o_ref : (tb, action_dim)
    """
    w1 = w1_ref[...]                          # tiny, loop-invariant
    b1 = b1_ref[...]
    w2 = w2_ref[...]
    b2 = b2_ref[...]

    def chunk(r):
        # Cast-on-load: x may arrive as bf16 (DMA bandwidth); all math is f32
        # (v5e VPU has no bf16).
        xc = x_ref[pl.ds(r, cb), :].astype(jnp.float32)        # (cb, obs_dim)
        # Layer 1 on the MXU: K = obs_dim is tiny, padding is free in slot
        # terms; bias + ReLU on the VPU on the lane-dense (cb, 128) tile.
        h = jnp.dot(xc, w1, preferred_element_type=jnp.float32) + b1
        h = jnp.maximum(h, 0.0)
        # Layer 2 on the MXU: K = hidden = 128 matches the systolic array.
        out = jnp.dot(h, w2, preferred_element_type=jnp.float32) + b2
        o_ref[pl.ds(r, cb), :] = out.astype(o_ref.dtype)        # (cb, act)

    if n_chunks == 1:
        chunk(0)
    else:
        # Chunk over rows so the live hidden tile stays ~cb*128*4 bytes
        # (~32 vregs at cb=256) instead of spilling a full (tb, 128) h.
        def body(c, carry):
            chunk(pl.multiple_of(c * cb, cb))
            return carry
        lax.fori_loop(0, n_chunks, body, 0, unroll=True)


def _round_up(x, m):
    return ((x + m - 1) // m) * m


@functools.partial(jax.jit, static_argnames=("block_b", "chunk_b"))
def qnetwork_forward(x, w1, b1, w2, b2, *, block_b=2048, chunk_b=256):
    """QNetwork forward.

    x : (B, obs_dim) f32 (or bf16 - cast to f32 inside the kernel)
    w1: (obs_dim, hidden)     b1: (1, hidden)
    w2: (hidden, action_dim)  b2: (1, action_dim)
    Returns (B, action_dim) f32.
    """
    B, obs_dim = x.shape
    hidden = w1.shape[1]
    action_dim = w2.shape[1]
    assert block_b % chunk_b == 0, "block_b must be a multiple of chunk_b"

    # Batch tile (rows).  Small batches: one tile rounded to sublane (8)
    # granularity, single chunk, usually zero wrapper ops.  Large batches:
    # big tiles (per-grid-step overhead dominates the tiny DMA), capped at
    # ceil(B/2) so the parallel grid has >= 2 steps for v7x's 2 TensorCores.
    if B <= chunk_b:
        tb = _round_up(B, 8)
        cb = tb
    else:
        tb = min(block_b, _round_up(B, chunk_b))
        if B >= 2048:
            tb = min(tb, _round_up(pl.cdiv(B, 2), chunk_b))
        cb = chunk_b
    n_chunks = tb // cb
    grid_b = pl.cdiv(B, tb)
    b_pad = grid_b * tb

    if b_pad != B:                           # ragged batch -> zero-pad rows
        x = jnp.pad(x, ((0, b_pad - B), (0, 0)))

    flops = 2 * B * (obs_dim * hidden + hidden * action_dim)
    bytes_accessed = (
        x.size * x.dtype.itemsize                       # streamed activations
        + b_pad * action_dim * 4                        # output
        + (w1.size + b1.size + w2.size + b2.size) * 4)  # resident params (~3.6 KB)
    cost = pl.CostEstimate(flops=flops, transcendentals=0,
                           bytes_accessed=bytes_accessed)

    kernel = functools.partial(_qnet_kernel, cb=cb, n_chunks=n_chunks)
    out = pl.pallas_call(
        kernel,
        out_shape=jax.ShapeDtypeStruct((b_pad, action_dim), jnp.float32),
        grid_spec=pltpu.PrefetchScalarGridSpec(
            num_scalar_prefetch=0,
            grid=(grid_b,),
            in_specs=[
                pl.BlockSpec((tb, obs_dim), lambda i: (i, 0)),          # x rows
                pl.BlockSpec((obs_dim, hidden), lambda i: (0, 0)),      # W1^T
                pl.BlockSpec((1, hidden), lambda i: (0, 0)),            # b1
                pl.BlockSpec((hidden, action_dim), lambda i: (0, 0)),   # W2^T
                pl.BlockSpec((1, action_dim), lambda i: (0, 0)),        # b2
            ],
            out_specs=pl.BlockSpec((tb, action_dim), lambda i: (i, 0)),
        ),
        compiler_params=pltpu.CompilerParams(
            dimension_semantics=("parallel",)),          # shards across v7x TCs
        cost_estimate=cost,
    )(x, w1, b1, w2, b2)

    return out[:B] if b_pad != B else out
    # TODO(synk): for latency-critical B<~64 action selection, a plain-XLA
    # fallback (reference_forward) can skip the kernel launch entirely.


def init_qnetwork_params(key, obs_dim, action_dim, hidden=128, dtype=jnp.float32):
    """torch.nn.Linear-style init (U(+-1/sqrt(fan_in))).  Weights are stored
    pre-transposed as (in, out) and biases as (1, out) rows, i.e. exactly
    `linear.weight.T` / `linear.bias[None]` of the PyTorch module, so the
    wrapper never has to transpose anything per call."""
    k1, k2, k3, k4 = jax.random.split(key, 4)
    bound1 = 1.0 / (obs_dim ** 0.5)
    bound2 = 1.0 / (hidden ** 0.5)
    w1 = jax.random.uniform(k1, (obs_dim, hidden), dtype, -bound1, bound1)
    b1 = jax.random.uniform(k2, (1, hidden), dtype, -bound1, bound1)
    w2 = jax.random.uniform(k3, (hidden, action_dim), dtype, -bound2, bound2)
    b2 = jax.random.uniform(k4, (1, action_dim), dtype, -bound2, bound2)
    return w1, b1, w2, b2


def reference_forward(x, w1, b1, w2, b2):
    h = jnp.maximum(x @ w1 + b1, 0.0)
    return h @ w2 + b2


if __name__ == "__main__":
    key = jax.random.PRNGKey(0)
    kx, kp = jax.random.split(key)

    obs_dim = 4       # e.g. CartPole observation dim
    action_dim = 2    # e.g. CartPole action dim
    params = init_qnetwork_params(kp, obs_dim, action_dim)

    # 1) Typical DQN minibatch: one grid step, one chunk, no pad/transpose ops.
    x_small = jax.random.normal(kx, (32, obs_dim), dtype=jnp.float32)
    out = jax.block_until_ready(qnetwork_forward(x_small, *params))
    ref = reference_forward(x_small, *params)
    assert out.shape == (32, action_dim)
    assert jnp.allclose(out, ref, atol=1e-4, rtol=1e-4)

    # 2) Ragged batch (300 rows -> padded to 512): two 256-row chunks in-kernel.
    x_rag = jax.random.normal(kx, (300, obs_dim), dtype=jnp.float32)
    out = jax.block_until_ready(qnetwork_forward(x_rag, *params))
    ref = reference_forward(x_rag, *params)
    assert out.shape == (300, action_dim)
    assert jnp.allclose(out, ref, atol=1e-4, rtol=1e-4)

    # 3) Multi-step "parallel" grid (3 tiles of 256 rows).
    x_big = jax.random.normal(kx, (640, obs_dim), dtype=jnp.float32)
    out = jax.block_until_ready(qnetwork_forward(x_big, *params, block_b=256))
    ref = reference_forward(x_big, *params)
    assert out.shape == (640, action_dim)
    assert jnp.allclose(out, ref, atol=1e-4, rtol=1e-4)

    # 4) bf16 input streaming: caller provides bf16, kernel computes in f32.
    out_bf = jax.block_until_ready(
        qnetwork_forward(x_small.astype(jnp.bfloat16), *params))
    ref_bf = reference_forward(
        x_small.astype(jnp.bfloat16).astype(jnp.float32), *params)
    assert jnp.allclose(out_bf, ref_bf, atol=1e-4, rtol=1e-4)

    print("KERNEL_OK")
</pallas_src>

<mosaic_0001>
module attributes {stable_mosaic.version = 11 : i64} {
  func.func @_qnet_kernel(%arg0: i32, %arg1: memref<32x4xf32, #tpu.memory_space<vmem>>, %arg2: memref<4x128xf32, #tpu.memory_space<vmem>>, %arg3: memref<1x128xf32, #tpu.memory_space<vmem>>, %arg4: memref<128x2xf32, #tpu.memory_space<vmem>>, %arg5: memref<1x2xf32, #tpu.memory_space<vmem>>, %arg6: memref<32x2xf32, #tpu.memory_space<vmem>>) attributes {dimension_semantics = [#tpu.dimension_semantics<parallel>], iteration_bounds = array<i64: 1>, scalar_prefetch = 0 : i64, scratch_operands = 0 : i64, tpu.core_type = #tpu.core_type<tc>, window_params = [{transform_indices = @transform_0, window_bounds = array<i64: 32, 4>}, {pipeline_mode = #tpu.pipeline_mode<synchronous>, transform_indices = @transform_1, window_bounds = array<i64: 4, 128>}, {pipeline_mode = #tpu.pipeline_mode<synchronous>, transform_indices = @transform_2, window_bounds = array<i64: 1, 128>}, {pipeline_mode = #tpu.pipeline_mode<synchronous>, transform_indices = @transform_3, window_bounds = array<i64: 128, 2>}, {pipeline_mode = #tpu.pipeline_mode<synchronous>, transform_indices = @transform_4, window_bounds = array<i64: 1, 2>}, {transform_indices = @transform_5, window_bounds = array<i64: 32, 2>}]} {
    %c0 = arith.constant 0 : index
    %c0_0 = arith.constant 0 : index
    %0 = vector.load %arg2[%c0, %c0_0] : memref<4x128xf32, #tpu.memory_space<vmem>>, vector<4x128xf32>
    %c0_1 = arith.constant 0 : index
    %c0_2 = arith.constant 0 : index
    %1 = vector.load %arg3[%c0_1, %c0_2] : memref<1x128xf32, #tpu.memory_space<vmem>>, vector<1x128xf32>
    %c0_3 = arith.constant 0 : index
    %c0_4 = arith.constant 0 : index
    %2 = vector.load %arg4[%c0_3, %c0_4] : memref<128x2xf32, #tpu.memory_space<vmem>>, vector<128x2xf32>
    %c0_5 = arith.constant 0 : index
    %c0_6 = arith.constant 0 : index
    %3 = vector.load %arg5[%c0_5, %c0_6] : memref<1x2xf32, #tpu.memory_space<vmem>>, vector<1x2xf32>
    %c0_7 = arith.constant 0 : index
    %c0_8 = arith.constant 0 : index
    %4 = vector.load %arg1[%c0_7, %c0_8] : memref<32x4xf32, #tpu.memory_space<vmem>>, vector<32x4xf32>
    %cst = arith.constant dense<0.000000e+00> : vector<32x128xf32>
    %5 = tpu.matmul %4, %0, %cst {dimension_numbers = #tpu.dot_dimension_numbers<[1], [0], [0], [1], [0, 0, 1, 1], [], []>} : vector<32x4xf32>, vector<4x128xf32>, vector<32x128xf32> -> vector<32x128xf32>
    %6 = vector.broadcast %1 : vector<1x128xf32> to vector<32x128xf32>
    %7 = arith.addf %5, %6 : vector<32x128xf32>
    %cst_9 = arith.constant 0.000000e+00 : f32
    %8 = vector.broadcast %cst_9 : f32 to vector<32x128xf32>
    %9 = arith.maximumf %7, %8 : vector<32x128xf32>
    %cst_10 = arith.constant dense<0.000000e+00> : vector<32x2xf32>
    %10 = tpu.matmul %9, %2, %cst_10 {dimension_numbers = #tpu.dot_dimension_numbers<[1], [0], [0], [1], [0, 0, 1, 1], [], []>} : vector<32x128xf32>, vector<128x2xf32>, vector<32x2xf32> -> vector<32x2xf32>
    %11 = vector.broadcast %3 : vector<1x2xf32> to vector<32x2xf32>
    %12 = arith.addf %10, %11 : vector<32x2xf32>
    %c0_11 = arith.constant 0 : index
    %c0_12 = arith.constant 0 : index
    %13 = vector.load %arg6[%c0_11, %c0_12] : memref<32x2xf32, #tpu.memory_space<vmem>>, vector<32x2xf32>
    tpu.vector_store %arg6[%c0_11, %c0_12], %12 {strides = array<i32>} : memref<32x2xf32, #tpu.memory_space<vmem>>, vector<32x2xf32>,
    return
  }
  func.func @transform_0(%arg0: i32) -> (i32, i32) {
    %c0_i32 = arith.constant 0 : i32
    %c0_i32_0 = arith.constant 0 : i32
    return %arg0, %c0_i32 : i32, i32
  }
  func.func @transform_1(%arg0: i32) -> (i32, i32) {
    %c0_i32 = arith.constant 0 : i32
    %c0_i32_0 = arith.constant 0 : i32
    %c0_i32_1 = arith.constant 0 : i32
    return %c0_i32, %c0_i32_0 : i32, i32
  }
  func.func @transform_2(%arg0: i32) -> (i32, i32) {
    %c0_i32 = arith.constant 0 : i32
    %c0_i32_0 = arith.constant 0 : i32
    %c0_i32_1 = arith.constant 0 : i32
    return %c0_i32, %c0_i32_0 : i32, i32
  }
  func.func @transform_3(%arg0: i32) -> (i32, i32) {
    %c0_i32 = arith.constant 0 : i32
    %c0_i32_0 = arith.constant 0 : i32
    %c0_i32_1 = arith.constant 0 : i32
    return %c0_i32, %c0_i32_0 : i32, i32
  }
  func.func @transform_4(%arg0: i32) -> (i32, i32) {
    %c0_i32 = arith.constant 0 : i32
    %c0_i32_0 = arith.constant 0 : i32
    %c0_i32_1 = arith.constant 0 : i32
    return %c0_i32, %c0_i32_0 : i32, i32
  }
  func.func @transform_5(%arg0: i32) -> (i32, i32) {
    %c0_i32 = arith.constant 0 : i32
    %c0_i32_0 = arith.constant 0 : i32
    return %arg0, %c0_i32 : i32, i32
  }
}

</mosaic_0001>

<llo_original>
// kernel: qnetwork_forward.1
$region0: #{qnetwork_forward.1}
  #allocation0 [shape = 'u32[]', space=smem, size = 0x4, offset = 0x4, fixed_abs, tag = 'smem constant byte address 0x4 - core index']
  #allocation1 [shape = 'u32[72,128]{1,0:T(1,128)}', space=vmem, size = 0x9000, scoped, tag = 'internal scratch']
  %s0 = inlined_call_operand.vmem [shape: f32[32,4], index: 0, kind: input, shape index: {}]
  %s1 = inlined_call_operand.vmem [shape: f32[4,128], index: 1, kind: input, shape index: {}]
  %s2 = inlined_call_operand.vmem [shape: f32[1,128], index: 2, kind: input, shape index: {}]
  %s3 = inlined_call_operand.vmem [shape: f32[128,2], index: 3, kind: input, shape index: {}]
  %s4 = inlined_call_operand.vmem [shape: f32[1,2], index: 4, kind: input, shape index: {}]
  %s5 = inlined_call_operand.vmem [shape: f32[32,2], index: 5, kind: output, shape index: {}]
  %s6 = sld [smem:[#allocation0]]
  $region30: #{qnetwork_forward.1} parent=0
    _
  %s8 = ssub.s32 1, %s6
  %s9 = scalar_select 0, %s8, %s6
  // Predicated region
  $region2: #{qnetwork_forward.1} parent=0 // pred_check
    _
  $region3: #{qnetwork_forward.1} parent=0 // pred_check_branch
    %11 = sbr.rel (0) target = $region5
  $region4: #{qnetwork_forward.1} parent=0 // pred_region
    _
  $region5: #{qnetwork_forward.1} parent=0 // pred_fallthru
    _
  // Predicated region
  $region6: #{qnetwork_forward.1} parent=0 // pred_check
    _
  $region7: #{qnetwork_forward.1} parent=0 // pred_check_branch
    %13 = sbr.rel (0) target = $region9
  $region8: #{qnetwork_forward.1} parent=0 // pred_region
    _
  $region9: #{qnetwork_forward.1} parent=0 // pred_fallthru
    _
  // Predicated region
  $region10: #{qnetwork_forward.1} parent=0 // pred_check
    _
  $region11: #{qnetwork_forward.1} parent=0 // pred_check_branch
    %15 = sbr.rel (0) target = $region13
  $region12: #{qnetwork_forward.1} parent=0 // pred_region
    _
  $region13: #{qnetwork_forward.1} parent=0 // pred_fallthru
    _
  // Predicated region
  $region14: #{qnetwork_forward.1} parent=0 // pred_check
    _
  $region15: #{qnetwork_forward.1} parent=0 // pred_check_branch
    %17 = sbr.rel (0) target = $region17
  $region16: #{qnetwork_forward.1} parent=0 // pred_region
    _
  $region17: #{qnetwork_forward.1} parent=0 // pred_fallthru
    _
  // Predicated region
  $region18: #{qnetwork_forward.1} parent=0 // pred_check
    _
  $region19: #{qnetwork_forward.1} parent=0 // pred_check_branch
    %19 = sbr.rel (0) target = $region21
  $region20: #{qnetwork_forward.1} parent=0 // pred_region
    _
  $region21: #{qnetwork_forward.1} parent=0 // pred_fallthru
    _
  %v20 = vld [vmem:[%s1] sm:$0xf]
  %v21 = vld [vmem:[%s2] sm:$0x1]
  %v22 = vld [vmem:[%s3] sm:$0xff]
  %v23 = vld [vmem:[%s3 + $0x8] sm:$0xff]
  %v24 = vld [vmem:[%s3 + $0x10] sm:$0xff]
  %v25 = vld [vmem:[%s3 + $0x18] sm:$0xff]
  %v26 = vld [vmem:[%s3 + $0x20] sm:$0xff]
  %v27 = vld [vmem:[%s3 + $0x28] sm:$0xff]
  %v28 = vld [vmem:[%s3 + $0x30] sm:$0xff]
  %v29 = vld [vmem:[%s3 + $0x38] sm:$0xff]
  %v30 = vld [vmem:[%s3 + $0x40] sm:$0xff]
  %v31 = vld [vmem:[%s3 + $0x48] sm:$0xff]
  %v32 = vld [vmem:[%s3 + $0x50] sm:$0xff]
  %v33 = vld [vmem:[%s3 + $0x58] sm:$0xff]
  %v34 = vld [vmem:[%s3 + $0x60] sm:$0xff]
  %v35 = vld [vmem:[%s3 + $0x68] sm:$0xff]
  %v36 = vld [vmem:[%s3 + $0x70] sm:$0xff]
  %v37 = vld [vmem:[%s3 + $0x78] sm:$0xff]
  %v38 = vld [vmem:[%s4] sm:$0x1]
  %v39 = vld [vmem:[%s0] sm:$0xff]
  %v40 = vld [vmem:[%s0 + $0x8] sm:$0xff]
  %v41 = vld [vmem:[%s0 + $0x10] sm:$0xff]
  %v42 = vld [vmem:[%s0 + $0x18] sm:$0xff]
  %v44 = vperm.slane %v21, 0
  %vm46 = vcmask 31744
  %v48 = vsel %vm46, %v39, 0
  %v51 = vsel %vm46, %v40, 0
  %v54 = vsel %vm46, %v41, 0
  %v57 = vsel %vm46, %v42, 0
  %vm59 = vcmask 1043456
  %v61 = vsel %vm59, %v20, 0
  %63 = vmatpush.msra.mxu0 0.0
  %64 = vmatpush.msra.mxu0 0.0
  %65 = vmatpush.msra.mxu0 0.0
  %66 = vmatpush.msra.mxu0 0.0
  %67 = vmatpush.msra.mxu0 0.0
  %68 = vmatpush.msra.mxu0 0.0
  %69 = vmatpush.msra.mxu0 0.0
  %70 = vmatpush.msra.mxu0 0.0
  %71 = vmatpush.msra.mxu0 0.0
  %72 = vmatpush.msra.mxu0 0.0
  %73 = vmatpush.msra.mxu0 0.0
  %74 = vmatpush.msra.mxu0 0.0
  %75 = vmatpush.msra.mxu0 0.0
  %76 = vmatpush.msra.mxu0 0.0
  %77 = vmatpush.msra.mxu0 0.0
  %78 = vmatpush.msra.mxu0 %v61
  %79 = vmatmul.f32.gmra.mxu0 %v48
  %v80 = vpop.f32.mrf.mxu0
  %v81 = vadd.f32 %v44, %v80
  %82 = vmatmul.f32.gmra.mxu0 %v51
  %v83 = vpop.f32.mrf.mxu0
  %v84 = vadd.f32 %v44, %v83
  %85 = vmatmul.f32.gmra.mxu0 %v54
  %v86 = vpop.f32.mrf.mxu0
  %v87 = vadd.f32 %v44, %v86
  %88 = vmatmul.f32.gmra.mxu0 %v57
  %v89 = vpop.f32.mrf.mxu0
  %v90 = vadd.f32 %v44, %v89
  %91 = vdwg.mxu0
  %v92 = vmax.f32 %v81, 0.0
  %v93 = vmax.f32 %v84, 0.0
  %v94 = vmax.f32 %v87, 0.0
  %v95 = vmax.f32 %v90, 0.0
  %v97 = vperm.slane %v38, 0
  %99 = vmatpush.msra.mxu0 %v37
  %100 = vmatpush.msra.mxu0 %v36
  %101 = vmatpush.msra.mxu0 %v35
  %102 = vmatpush.msra.mxu0 %v34
  %103 = vmatpush.msra.mxu0 %v33
  %104 = vmatpush.msra.mxu0 %v32
  %105 = vmatpush.msra.mxu0 %v31
  %106 = vmatpush.msra.mxu0 %v30
  %107 = vmatpush.msra.mxu0 %v29
  %108 = vmatpush.msra.mxu0 %v28
  %109 = vmatpush.msra.mxu0 %v27
  %110 = vmatpush.msra.mxu0 %v26
  %111 = vmatpush.msra.mxu0 %v25
  %112 = vmatpush.msra.mxu0 %v24
  %113 = vmatpush.msra.mxu0 %v23
  %114 = vmatpush.msra.mxu0 %v22
  %115 = vmatmul.f32.gmra.mxu0 %v92
  %v116 = vpop.f32.mrf.mxu0
  %v117 = vadd.f32 %v97, %v116
  %118 = vmatmul.f32.gmra.mxu0 %v93
  %v119 = vpop.f32.mrf.mxu0
  %v120 = vadd.f32 %v97, %v119
  %121 = vmatmul.f32.gmra.mxu0 %v94
  %v122 = vpop.f32.mrf.mxu0
  %v123 = vadd.f32 %v97, %v122
  %124 = vmatmul.f32.gmra.mxu0 %v95
  %v125 = vpop.f32.mrf.mxu0
  %v126 = vadd.f32 %v97, %v125
  %127 = vdwg.mxu0
  %vm128 = vcmask 15360
  %129 = vst.msk [vmem:[%s5] sm:$0xff] %vm128, %v117
  %130 = vst.msk [vmem:[%s5 + $0x8] sm:$0xff] %vm128, %v120
  %131 = vst.msk [vmem:[%s5 + $0x10] sm:$0xff] %vm128, %v123
  %132 = vst.msk [vmem:[%s5 + $0x18] sm:$0xff] %vm128, %v126
  // Predicated region
  $region22: #{qnetwork_forward.1} parent=0 // pred_check
    _
  $region23: #{qnetwork_forward.1} parent=0 // pred_check_branch
    %134 = sbr.rel (0) target = $region25
  $region24: #{qnetwork_forward.1} parent=0 // pred_region
    _
  $region25: #{qnetwork_forward.1} parent=0 // pred_fallthru
    _
  // Predicated region
  $region26: #{qnetwork_forward.1} parent=0 // pred_check
    _
  $region27: #{qnetwork_forward.1} parent=0 // pred_check_branch
    %136 = sbr.rel (0) target = $region29
  $region28: #{qnetwork_forward.1} parent=0 // pred_region
    _
  $region29: #{qnetwork_forward.1} parent=0 // pred_fallthru
    _

</llo_original>
